<compile_context>
chip_gen: v7x
topology: tpu7x:2x2x1
jax: 0.10.0
libtpu: 0.0.40
codegen_flags: <defaults>
</compile_context>

<pallas_src>
from functools import partial

import numpy as np
import jax
import jax.numpy as jnp
from jax.experimental import pallas as pl
from jax.experimental.pallas import tpu as pltpu


def _correlation_kernel(x_ref, o_ref, *, D, stride, eps):
    # x_ref: (1, stride*D, TT)  row index = s*D + d, window index T in lanes
    # o_ref: (1, F, TT)         strictly-lower-triangular correlations (lane-dense)
    S = stride
    inv_s = 1.0 / float(S)
    x = x_ref[0].astype(jnp.float32)                       # (S*D, TT)

    # Window-position slabs: static sublane slices, each a dense (D, TT) tile.
    xs = [x[s * D:(s + 1) * D] for s in range(S)]

    # Per-channel mean over the window (== AvgPool2d((stride, 1))).
    mean = xs[0]
    for s in range(1, S):
        mean = mean + xs[s]
    mean = mean * inv_s                                    # (D, TT)

    # Mean-subtracted slabs, per-channel variance and std.
    ms = [xs[s] - mean for s in range(S)]
    var = ms[0] * ms[0]
    for s in range(1, S):
        var = var + ms[s] * ms[s]
    std = jnp.sqrt(var * inv_s)                            # (D, TT)

    # Strictly-lower-triangular pairs in row-major order
    # (1,0),(2,0),(2,1),(3,0),... == torch.masked_select order.
    # Row-batched: row r covers pairs (r, 0..r-1) -> output rows
    # [r*(r-1)//2, r*(r-1)//2 + r).  D-1 slab stores, no concat of width-1 rows.
    # NOTE: keep this VPU path; an MXU dot_general over S would be badly
    # under-utilized at small stride (contraction depth == stride).
    for r in range(1, D):
        cov = ms[0][r:r + 1] * ms[0][:r]
        for s in range(1, S):
            cov = cov + ms[s][r:r + 1] * ms[s][:r]
        cov = cov * inv_s                                  # (r, TT)
        den = std[r:r + 1] * std[:r] + eps                 # den >= 0 -> add_eps == +eps
        off = r * (r - 1) // 2
        o_ref[0, off:off + r, :] = (cov / den).astype(o_ref.dtype)


@partial(jax.jit, static_argnames=("stride", "eps"))
def correlation(feature, stride, eps=1e-7):
    """Pallas implementation of Correlation.forward.  feature: (B, L, D)."""
    B, L, D = feature.shape
    assert L % stride == 0, "L must be divisible by stride"
    assert D >= 2, "need at least 2 channels"
    T = L // stride
    F = D * (D - 1) // 2
    DS = D * stride
    itemsize = jnp.dtype(feature.dtype).itemsize

    def _cdiv(a, b):
        return -(-a // b)

    def _rup(v, m):
        return _cdiv(v, m) * m

    try:
        vmem_cap = int(pltpu.get_tpu_info().vmem_capacity_bytes)
    except Exception:
        vmem_cap = 64 << 20                      # conservative: v7x per-core VMEM

    def _per_step_bytes(tt):
        # double-buffered in/out blocks (sublane-padded) + single f32 intermediates
        in_blk = _rup(DS, 8) * tt * itemsize
        out_blk = _rup(F, 8) * tt * itemsize
        interm = (2 * _rup(DS, 8) + 3 * _rup(D, 8)
                  + _rup(max(D - 1, 1), 8) + _rup(F, 8)) * tt * 4
        return 2 * (in_blk + out_blk) + interm

    # Lane tile TT: from a ~2 MiB-per-step input byte budget, multiple of 128.
    LANE = 128
    budget = 2 << 20
    tt = max(LANE, (budget // max(1, DS * itemsize)) // LANE * LANE)
    tt = min(tt, 16384)
    t_ceil = _rup(T, LANE)
    tt = min(tt, t_ceil)
    # (a) fit comfortably inside scoped VMEM (v7x has only 64 MiB per core)
    while tt > LANE and _per_step_bytes(tt) > (2 * vmem_cap) // 5:
        tt = max(LANE, (tt // 2 // LANE) * LANE)
    # (b) keep enough grid steps for double-buffering / both v7x TensorCores
    while tt > LANE and B * _cdiv(t_ceil, tt) < 8:
        tt = max(LANE, (tt // 2 // LANE) * LANE)
    T_pad = _rup(T, tt)
    n_tt = T_pad // tt

    # Glue: (B, L, D) -> (B, T, S, D) -> (B, S, D, T) -> (B, S*D, T_pad).
    # Dense second-minor axis -> no strided sub-tile DMAs, no 8/stride inflation.
    xw = jnp.transpose(feature.reshape(B, T, stride, D), (0, 2, 3, 1)).reshape(B, DS, T)
    if T_pad != T:
        # zero-padded windows produce corr == 0 and are sliced off below
        xw = jnp.pad(xw, ((0, 0), (0, 0), (0, T_pad - T)))

    vmem_limit = int(min((3 * vmem_cap) // 4,
                         max(16 << 20, 4 * _per_step_bytes(tt))))

    cost = pl.CostEstimate(
        flops=int(B * T * (4 * DS + 4 * F * stride + 4 * F + 2 * D)),
        transcendentals=int(B * T * D),
        bytes_accessed=int(B * (DS + _rup(F, 8)) * T_pad * itemsize),
    )

    kernel = partial(_correlation_kernel, D=D, stride=stride, eps=eps)
    out = pl.pallas_call(
        kernel,
        out_shape=jax.ShapeDtypeStruct((B, F, T_pad), feature.dtype),
        grid=(B, n_tt),
        in_specs=[pl.BlockSpec((1, DS, tt), lambda b, t: (b, 0, t))],
        out_specs=pl.BlockSpec((1, F, tt), lambda b, t: (b, 0, t)),
        compiler_params=pltpu.CompilerParams(
            dimension_semantics=("parallel", "parallel"),
            vmem_limit_bytes=vmem_limit,
        ),
        cost_estimate=cost,
    )(xw)

    # Glue back: slice off padded lanes, then (B, F, T) -> (B, T, F).
    # TODO(synk): if the consumer can take (B, F, T) directly, drop this transpose.
    return jnp.transpose(out[:, :, :T], (0, 2, 1))


def correlation_ref(feature, stride, eps=1e-7):
    """Pure-JAX reference mirroring the PyTorch module (exact f32 math)."""
    B, L, D = feature.shape
    T = L // stride
    x = feature.reshape(B * T, stride, D).astype(jnp.float32)
    means = jnp.mean(x, axis=1, keepdims=True)
    ms = x - means
    cov = jnp.sum(ms[:, :, :, None] * ms[:, :, None, :], axis=1) / stride
    std = jnp.sqrt(jnp.mean(ms * ms, axis=1))
    den = std[:, :, None] * std[:, None, :]
    den = den + jnp.where(den < 0, -eps, eps)
    corr = cov / den
    mask = np.tril(np.ones((D, D), dtype=bool), -1).reshape(-1)   # strictly lower
    corr_sel = corr.reshape(B * T, D * D)[:, mask]
    return corr_sel.reshape(B, T, D * (D - 1) // 2).astype(feature.dtype)


if __name__ == "__main__":
    # Small shape consistent with the module: B=2, L=16, D=4, stride=2.
    key = jax.random.PRNGKey(0)
    B, L, D, stride = 2, 16, 4, 2
    feature = jax.random.normal(key, (B, L, D), dtype=jnp.float32)

    out = jax.block_until_ready(correlation(feature, stride=stride))
    ref = correlation_ref(feature, stride)
    assert out.shape == (B, L // stride, D * (D - 1) // 2)
    np.testing.assert_allclose(np.asarray(out), np.asarray(ref), rtol=1e-5, atol=1e-5)

    # Second shape that exercises lane tiling over T (T = 640 -> multiple grid steps).
    B2, stride2, D2, T2 = 1, 2, 4, 640
    feature2 = jax.random.normal(
        jax.random.PRNGKey(1), (B2, T2 * stride2, D2), dtype=jnp.float32
    )
    out2 = jax.block_until_ready(correlation(feature2, stride=stride2))
    ref2 = correlation_ref(feature2, stride2)
    np.testing.assert_allclose(np.asarray(out2), np.asarray(ref2), rtol=1e-5, atol=1e-5)

    print("KERNEL_OK")
</pallas_src>

<mosaic_0001>
module attributes {stable_mosaic.version = 11 : i64} {
  func.func @_correlation_kernel(%arg0: i32, %arg1: i32, %arg2: memref<1x8x128xf32, #tpu.memory_space<vmem>>, %arg3: memref<1x6x128xf32, #tpu.memory_space<vmem>>) attributes {dimension_semantics = [#tpu.dimension_semantics<parallel>, #tpu.dimension_semantics<parallel>], iteration_bounds = array<i64: 2, 1>, scalar_prefetch = 0 : i64, scratch_operands = 0 : i64, tpu.core_type = #tpu.core_type<tc>, window_params = [{transform_indices = @transform_0, window_bounds = array<i64: 1, 8, 128>}, {transform_indices = @transform_1, window_bounds = array<i64: 1, 6, 128>}]} {
    %c0 = arith.constant 0 : index
    %c0_0 = arith.constant 0 : index
    %c0_1 = arith.constant 0 : index
    %0 = vector.load %arg2[%c0, %c0_0, %c0_1] : memref<1x8x128xf32, #tpu.memory_space<vmem>>, vector<1x8x128xf32>
    %1 = vector.shape_cast %0 : vector<1x8x128xf32> to vector<8x128xf32>
    %2 = vector.extract_strided_slice %1 {offsets = [0, 0], sizes = [4, 128], strides = [1, 1]} : vector<8x128xf32> to vector<4x128xf32>
    %3 = vector.extract_strided_slice %1 {offsets = [4, 0], sizes = [4, 128], strides = [1, 1]} : vector<8x128xf32> to vector<4x128xf32>
    %4 = arith.addf %2, %3 : vector<4x128xf32>
    %cst = arith.constant 5.000000e-01 : f32
    %5 = vector.broadcast %cst : f32 to vector<4x128xf32>
    %6 = arith.mulf %4, %5 : vector<4x128xf32>
    %7 = arith.subf %2, %6 : vector<4x128xf32>
    %8 = arith.subf %3, %6 : vector<4x128xf32>
    %9 = arith.mulf %7, %7 : vector<4x128xf32>
    %10 = arith.mulf %8, %8 : vector<4x128xf32>
    %11 = arith.addf %9, %10 : vector<4x128xf32>
    %cst_2 = arith.constant 5.000000e-01 : f32
    %12 = vector.broadcast %cst_2 : f32 to vector<4x128xf32>
    %13 = arith.mulf %11, %12 : vector<4x128xf32>
    %14 = math.sqrt %13 : vector<4x128xf32>
    %15 = vector.extract_strided_slice %7 {offsets = [1, 0], sizes = [1, 128], strides = [1, 1]} : vector<4x128xf32> to vector<1x128xf32>
    %16 = vector.extract_strided_slice %7 {offsets = [0, 0], sizes = [1, 128], strides = [1, 1]} : vector<4x128xf32> to vector<1x128xf32>
    %17 = arith.mulf %15, %16 : vector<1x128xf32>
    %18 = vector.extract_strided_slice %8 {offsets = [1, 0], sizes = [1, 128], strides = [1, 1]} : vector<4x128xf32> to vector<1x128xf32>
    %19 = vector.extract_strided_slice %8 {offsets = [0, 0], sizes = [1, 128], strides = [1, 1]} : vector<4x128xf32> to vector<1x128xf32>
    %20 = arith.mulf %18, %19 : vector<1x128xf32>
    %21 = arith.addf %17, %20 : vector<1x128xf32>
    %cst_3 = arith.constant 5.000000e-01 : f32
    %22 = vector.broadcast %cst_3 : f32 to vector<1x128xf32>
    %23 = arith.mulf %21, %22 : vector<1x128xf32>
    %24 = vector.extract_strided_slice %14 {offsets = [1, 0], sizes = [1, 128], strides = [1, 1]} : vector<4x128xf32> to vector<1x128xf32>
    %25 = vector.extract_strided_slice %14 {offsets = [0, 0], sizes = [1, 128], strides = [1, 1]} : vector<4x128xf32> to vector<1x128xf32>
    %26 = arith.mulf %24, %25 : vector<1x128xf32>
    %cst_4 = arith.constant 1.000000e-07 : f32
    %27 = vector.broadcast %cst_4 : f32 to vector<1x128xf32>
    %28 = arith.addf %26, %27 : vector<1x128xf32>
    %29 = arith.divf %23, %28 : vector<1x128xf32>
    %c0_5 = arith.constant 0 : index
    %c0_6 = arith.constant 0 : index
    %c0_7 = arith.constant 0 : index
    %30 = vector.load %arg3[%c0_5, %c0_6, %c0_7] : memref<1x6x128xf32, #tpu.memory_space<vmem>>, vector<1x1x128xf32>
    %31 = vector.shape_cast %30 : vector<1x1x128xf32> to vector<1x128xf32>
    %32 = vector.shape_cast %29 : vector<1x128xf32> to vector<1x1x128xf32>
    tpu.vector_store %arg3[%c0_5, %c0_6, %c0_7], %32 {strides = array<i32>} : memref<1x6x128xf32, #tpu.memory_space<vmem>>, vector<1x1x128xf32>,
    %33 = vector.extract_strided_slice %7 {offsets = [2, 0], sizes = [1, 128], strides = [1, 1]} : vector<4x128xf32> to vector<1x128xf32>
    %34 = vector.extract_strided_slice %7 {offsets = [0, 0], sizes = [2, 128], strides = [1, 1]} : vector<4x128xf32> to vector<2x128xf32>
    %35 = vector.broadcast %33 : vector<1x128xf32> to vector<2x128xf32>
    %36 = arith.mulf %35, %34 : vector<2x128xf32>
    %37 = vector.extract_strided_slice %8 {offsets = [2, 0], sizes = [1, 128], strides = [1, 1]} : vector<4x128xf32> to vector<1x128xf32>
    %38 = vector.extract_strided_slice %8 {offsets = [0, 0], sizes = [2, 128], strides = [1, 1]} : vector<4x128xf32> to vector<2x128xf32>
    %39 = vector.broadcast %37 : vector<1x128xf32> to vector<2x128xf32>
    %40 = arith.mulf %39, %38 : vector<2x128xf32>
    %41 = arith.addf %36, %40 : vector<2x128xf32>
    %cst_8 = arith.constant 5.000000e-01 : f32
    %42 = vector.broadcast %cst_8 : f32 to vector<2x128xf32>
    %43 = arith.mulf %41, %42 : vector<2x128xf32>
    %44 = vector.extract_strided_slice %14 {offsets = [2, 0], sizes = [1, 128], strides = [1, 1]} : vector<4x128xf32> to vector<1x128xf32>
    %45 = vector.extract_strided_slice %14 {offsets = [0, 0], sizes = [2, 128], strides = [1, 1]} : vector<4x128xf32> to vector<2x128xf32>
    %46 = vector.broadcast %44 : vector<1x128xf32> to vector<2x128xf32>
    %47 = arith.mulf %46, %45 : vector<2x128xf32>
    %cst_9 = arith.constant 1.000000e-07 : f32
    %48 = vector.broadcast %cst_9 : f32 to vector<2x128xf32>
    %49 = arith.addf %47, %48 : vector<2x128xf32>
    %50 = arith.divf %43, %49 : vector<2x128xf32>
    %c0_10 = arith.constant 0 : index
    %c1 = arith.constant 1 : index
    %c0_11 = arith.constant 0 : index
    %51 = vector.load %arg3[%c0_10, %c1, %c0_11] : memref<1x6x128xf32, #tpu.memory_space<vmem>>, vector<1x2x128xf32>
    %52 = vector.shape_cast %51 : vector<1x2x128xf32> to vector<2x128xf32>
    %53 = vector.shape_cast %50 : vector<2x128xf32> to vector<1x2x128xf32>
    tpu.vector_store %arg3[%c0_10, %c1, %c0_11], %53 {strides = array<i32>} : memref<1x6x128xf32, #tpu.memory_space<vmem>>, vector<1x2x128xf32>,
    %54 = vector.extract_strided_slice %7 {offsets = [3, 0], sizes = [1, 128], strides = [1, 1]} : vector<4x128xf32> to vector<1x128xf32>
    %55 = vector.extract_strided_slice %7 {offsets = [0, 0], sizes = [3, 128], strides = [1, 1]} : vector<4x128xf32> to vector<3x128xf32>
    %56 = vector.broadcast %54 : vector<1x128xf32> to vector<3x128xf32>
    %57 = arith.mulf %56, %55 : vector<3x128xf32>
    %58 = vector.extract_strided_slice %8 {offsets = [3, 0], sizes = [1, 128], strides = [1, 1]} : vector<4x128xf32> to vector<1x128xf32>
    %59 = vector.extract_strided_slice %8 {offsets = [0, 0], sizes = [3, 128], strides = [1, 1]} : vector<4x128xf32> to vector<3x128xf32>
    %60 = vector.broadcast %58 : vector<1x128xf32> to vector<3x128xf32>
    %61 = arith.mulf %60, %59 : vector<3x128xf32>
    %62 = arith.addf %57, %61 : vector<3x128xf32>
    %cst_12 = arith.constant 5.000000e-01 : f32
    %63 = vector.broadcast %cst_12 : f32 to vector<3x128xf32>
    %64 = arith.mulf %62, %63 : vector<3x128xf32>
    %65 = vector.extract_strided_slice %14 {offsets = [3, 0], sizes = [1, 128], strides = [1, 1]} : vector<4x128xf32> to vector<1x128xf32>
    %66 = vector.extract_strided_slice %14 {offsets = [0, 0], sizes = [3, 128], strides = [1, 1]} : vector<4x128xf32> to vector<3x128xf32>
    %67 = vector.broadcast %65 : vector<1x128xf32> to vector<3x128xf32>
    %68 = arith.mulf %67, %66 : vector<3x128xf32>
    %cst_13 = arith.constant 1.000000e-07 : f32
    %69 = vector.broadcast %cst_13 : f32 to vector<3x128xf32>
    %70 = arith.addf %68, %69 : vector<3x128xf32>
    %71 = arith.divf %64, %70 : vector<3x128xf32>
    %c0_14 = arith.constant 0 : index
    %c3 = arith.constant 3 : index
    %c0_15 = arith.constant 0 : index
    %72 = vector.load %arg3[%c0_14, %c3, %c0_15] : memref<1x6x128xf32, #tpu.memory_space<vmem>>, vector<1x3x128xf32>
    %73 = vector.shape_cast %72 : vector<1x3x128xf32> to vector<3x128xf32>
    %74 = vector.shape_cast %71 : vector<3x128xf32> to vector<1x3x128xf32>
    tpu.vector_store %arg3[%c0_14, %c3, %c0_15], %74 {strides = array<i32>} : memref<1x6x128xf32, #tpu.memory_space<vmem>>, vector<1x3x128xf32>,
    return
  }
  func.func @transform_0(%arg0: i32, %arg1: i32) -> (i32, i32, i32) {
    %c0_i32 = arith.constant 0 : i32
    %c0_i32_0 = arith.constant 0 : i32
    return %arg0, %c0_i32, %arg1 : i32, i32, i32
  }
  func.func @transform_1(%arg0: i32, %arg1: i32) -> (i32, i32, i32) {
    %c0_i32 = arith.constant 0 : i32
    %c0_i32_0 = arith.constant 0 : i32
    return %arg0, %c0_i32, %arg1 : i32, i32, i32
  }
}

</mosaic_0001>

<llo_original>
// kernel: correlation.1
$region0: #{correlation.1}
  #allocation0 [shape = 'u32[]', space=smem, size = 0x4, offset = 0x4, fixed_abs, tag = 'smem constant byte address 0x4 - core index']
  #allocation1 [shape = 'u32[144,128]{1,0:T(1,128)}', space=vmem, size = 0x12000, scoped, tag = 'internal scratch']
  %s0 = inlined_call_operand.vmem [shape: f32[2,8,128], index: 0, kind: input, shape index: {}]
  %s1 = inlined_call_operand.vmem [shape: f32[2,6,128], index: 1, kind: output, shape index: {}]
  %s2 = sld [smem:[#allocation0]]
  $region37: #{correlation.1} parent=0
    _
  %s4 = ssub.s32 1, %s2
  %s5 = scalar_select 0, %s4, %s2
  loop: start=0, step=1, limit=4
  $region2: #{correlation.1} parent=0 // loop_pre_header
    _
  $region3: #{correlation.1} parent=0 // loop_header
    %s7 = sphi 0, %s11
    %p8 = scmp.ge.s32.totalorder %s7, 4
    %s14 = sphi 0, %s26
    %s15 = sphi 0, %s22
    %s16 = sphi 0, %s14
    %s17 = sphi 0, %s15
    %s18 = sphi 0, %s16
    %s19 = sphi 0, %s17
    %s31 = sphi 0, %s33
    %s34 = sphi 0, %s31
    %s35 = sphi 0, %s34
    %s51 = sphi 0, %s35
    %s59 = sphi 0, %s61
    %s62 = sphi 0, %s59
    %s63 = sphi 0, %s62
    %s79 = sphi 0, %s63
  $region4: #{correlation.1} parent=0 // loop_header_branch
    %10 = sbr.rel (%p8) target = $region8
  $region5: #{correlation.1} parent=0 // loop_body
    %s12 = ssub.s32 %s7, 1
    %s13 = ssub.s32 %s7, 2
    %s20 = sadd.s32 1, %s15
    %p21 = scmp.ge.s32.totalorder %s20, 1
    %s22 = scalar_select %p21, 0, %s20
    %s23 = sadd.s32 1, %s14
    %s24 = scalar_select %p21, %s23, %s14
    %p25 = scmp.ge.s32.totalorder %s24, 2
    %s26 = scalar_select %p25, 0, %s24
    %s27 = ssub.s32 %s14, %s26
    %s28 = ssub.s32 %s15, %s22
    %s29 = sor.u32 %s27, %s28
    %p30 = scmp.eq.s32.totalorder %s29, 0
    %s32 = sadd.s32 %s31, 1
    %s33 = scalar_select %p30, %s31, %s32
    %p36 = pneg %p30
    %p37 = scmp.eq.s32.totalorder %s7, 1
    %p38 = por %p36, %p37
    %p39 = scmp.ne.s32.totalorder %s31, %s34
    %p40 = scmp.eq.s32.totalorder %s7, 0
    %p41 = por %p39, %p40
    %p42 = scmp.ne.s32.totalorder %s31, %s34
    %p43 = scmp.eq.s32.totalorder %s12, 1
    %p44 = por %p42, %p43
    %p45 = scmp.ne.s32.totalorder %s34, %s35
    %p46 = scmp.eq.s32.totalorder %s12, 0
    %p47 = por %p45, %p46
    %p48 = scmp.ne.s32.totalorder %s34, %s35
    %p49 = scmp.eq.s32.totalorder %s13, 1
    %p50 = por %p48, %p49
    %p52 = scmp.ne.s32.totalorder %s35, %s51
    %p53 = scmp.eq.s32.totalorder %s13, 0
    %p54 = por %p52, %p53
    %s55 = ssub.s32 %s14, %s26
    %s56 = ssub.s32 %s15, %s22
    %s57 = sor.u32 %s55, %s56
    %p58 = scmp.eq.s32.totalorder %s57, 0
    %s60 = sadd.s32 %s59, 1
    %s61 = scalar_select %p58, %s59, %s60
    %p64 = pneg %p58
    %p65 = scmp.eq.s32.totalorder %s7, 1
    %p66 = por %p64, %p65
    %p67 = scmp.ne.s32.totalorder %s59, %s62
    %p68 = scmp.eq.s32.totalorder %s7, 0
    %p69 = por %p67, %p68
    %p70 = scmp.ne.s32.totalorder %s59, %s62
    %p71 = scmp.eq.s32.totalorder %s12, 1
    %p72 = por %p70, %p71
    %p73 = scmp.ne.s32.totalorder %s62, %s63
    %p74 = scmp.eq.s32.totalorder %s12, 0
    %p75 = por %p73, %p74
    %p76 = scmp.ne.s32.totalorder %s62, %s63
    %p77 = scmp.eq.s32.totalorder %s13, 1
    %p78 = por %p76, %p77
    %p80 = scmp.ne.s32.totalorder %s63, %s79
    %p81 = scmp.eq.s32.totalorder %s13, 0
    %p82 = por %p80, %p81
    %p83 = scmp.le.s32.totalorder 1, %s7
    %p84 = scmp.lt.s32.totalorder %s7, 3
    %p85 = pnand %p83, %p84
    %p86 = pneg %p85
    // Predicated region
    $region9: #{correlation.1} parent=5 // pred_check
      _
    $region10: #{correlation.1} parent=5 // pred_check_branch
      %88 = sbr.rel (%p85) target = $region12
    $region11: #{correlation.1} parent=5 // pred_region
      %s89 = ssub.s32 %s7, 1
    $region12: #{correlation.1} parent=5 // pred_fallthru
      _
    %p90 = scmp.lt.s32.totalorder %s7, 2
    // Predicated region
    $region13: #{correlation.1} parent=5 // pred_check
      %p91 = pneg %p90
    $region14: #{correlation.1} parent=5 // pred_check_branch
      %93 = sbr.rel (%p91) target = $region16
    $region15: #{correlation.1} parent=5 // pred_region
      // Predicated region
      $region17: #{correlation.1} parent=15 // pred_check
        %p94 = pneg %p41
      $region18: #{correlation.1} parent=15 // pred_check_branch
        %96 = sbr.rel (%p94) target = $region20
      $region19: #{correlation.1} parent=15 // pred_region
        %p97 = scmp.lt.s32.totalorder %s14, 1
        %s98 = scalar_select %p97, %s14, 1
        %p99 = scmp.lt.s32.totalorder %s15, 0
        %s100 = scalar_select %p99, %s15, 0
        %s101 = sadd.s32 %s100, %s98
        %s102 = smul.addr %s101, 8
        %s103 = scalar_lea.vmem %s0, %s102
      $region20: #{correlation.1} parent=15 // pred_fallthru
        _
    $region16: #{correlation.1} parent=5 // pred_fallthru
      _
    %p104 = scmp.le.s32.totalorder 1, %s7
    %p105 = scmp.lt.s32.totalorder %s7, 3
    %p106 = pnand %p104, %p105
    %p107 = pneg %p106
    // Predicated region
    $region21: #{correlation.1} parent=5 // pred_check
      _
    $region22: #{correlation.1} parent=5 // pred_check_branch
      %109 = sbr.rel (%p106) target = $region24
    $region23: #{correlation.1} parent=5 // pred_region
      %s110 = ssub.s32 %s7, 1
      %p111 = scmp.lt.s32.totalorder %s16, 1
      %s112 = scalar_select %p111, %s16, 1
      %p113 = scmp.lt.s32.totalorder %s17, 0
      %s114 = scalar_select %p113, %s17, 0
      %s115 = sadd.s32 %s114, %s112
      %s116 = smul.addr %s115, 8
      %s117 = scalar_lea.vmem %s0, %s116
      %p118 = pneg %p47
      %p119 = pneg %p44
      %p120 = pneg %p75
      %p121 = pneg %p72
      %p122 = scmp.lt.s32.totalorder %s16, 1
      %s123 = scalar_select %p122, %s16, 1
      %p124 = scmp.lt.s32.totalorder %s17, 0
      %s125 = scalar_select %p124, %s17, 0
      %s126 = sadd.s32 %s125, %s123
      %s127 = smul.addr %s126, 8
      %s128 = scalar_lea.vmem %s1, %s127
      %p129 = scmp.lt.s32.totalorder %s16, 1
      %s130 = scalar_select %p129, %s16, 1
      %p131 = scmp.lt.s32.totalorder %s17, 0
      %s132 = scalar_select %p131, %s17, 0
      %s133 = sadd.s32 %s132, %s130
      %s134 = smul.addr %s133, 8
      %s135 = scalar_lea.vmem %s0, %s134
      %p136 = scmp.lt.s32.totalorder %s16, 1
      %s137 = scalar_select %p136, %s16, 1
      %p138 = scmp.lt.s32.totalorder %s17, 0
      %s139 = scalar_select %p138, %s17, 0
      %s140 = sadd.s32 %s139, %s137
      %s141 = smul.addr %s140, 8
      %s142 = scalar_lea.vmem %s1, %s141
      %v143 = vld [vmem:[%s135] sm:$0xff]
      %v145 = vrot.slane %v143, 4
      %v147 = vadd.f32 %v143, %v145
      %v148 = vmul.f32 %v147, 0.5
      %v149 = vsub.f32 %v143, %v148
      %v151 = vrot.slane %v148, 4
      %v153 = vsub.f32 %v143, %v151
      %v154 = vmul.f32 %v149, %v149
      %v155 = vmul.f32 %v153, %v153
      %v157 = vrot.slane %v155, 4
      %v159 = vadd.f32 %v154, %v157
      %v160 = vmul.f32 %v159, 0.5
      %v161 = vrsqrt.pop %v160
      %v162 = vmul.f32 %v160, %v161
      %vm163 = vcmp.eq.f32.partialorder %v160, inf
      %v164 = vsel %vm163, %v160, %v162
      %vm165 = vcmp.eq.f32.partialorder %v160, 0.0
      %v166 = vand.u32 %v160, 2147483648
      %v167 = vsel %vm165, %v166, %v164
      %v169 = vrot.slane %v149, 7
      %v171 = vmul.f32 %v149, %v169
      %v173 = vrot.slane %v153, 7
      %v175 = vmul.f32 %v153, %v173
      %v177 = vrot.slane %v175, 4
      %v179 = vadd.f32 %v171, %v177
      %v180 = vmul.f32 %v179, 0.5
      %v182 = vrot.slane %v167, 7
      %v184 = vmul.f32 %v167, %v182
      %v185 = vadd.f32 %v184, 1e-07
      %v186 = vrcp.pop %v185
      %v187 = vmul.f32 %v180, %v186
      %188 = vst [vmem:[%s142 - $0x1] sm:$0x2] %v187
      %v189 = vlaneseq
      %v190 = vshrl.u32 %v189, 7
      %v191 = vsub.s32 2, %v190
      %v192 = vrot.slane %v149, %v191
      %v193 = vmul.f32 %v192, %v149
      %v194 = vlaneseq
      %v195 = vshrl.u32 %v194, 7
      %v196 = vsub.s32 6, %v195
      %v197 = vrot.slane %v153, %v196
      %v198 = vmul.f32 %v197, %v153
      %v200 = vrot.slane %v198, 4
      %v202 = vadd.f32 %v193, %v200
      %v203 = vmul.f32 %v202, 0.5
      %v204 = vlaneseq
      %v205 = vshrl.u32 %v204, 7
      %v206 = vsub.s32 2, %v205
      %v207 = vrot.slane %v167, %v206
      %v208 = vmul.f32 %v207, %v167
      %v209 = vadd.f32 %v208, 1e-07
      %v210 = vrcp.pop %v209
      %v211 = vmul.f32 %v203, %v210
      %212 = vst [vmem:[%s142 + $0x1] sm:$0x3] %v211
      %v213 = vlaneseq
      %v214 = vshrl.u32 %v213, 7
      %v215 = vsub.s32 3, %v214
      %v216 = vrot.slane %v149, %v215
      %v217 = vmul.f32 %v216, %v149
      %v218 = vlaneseq
      %v219 = vshrl.u32 %v218, 7
      %v220 = vsub.s32 7, %v219
      %v221 = vrot.slane %v153, %v220
      %v222 = vmul.f32 %v221, %v153
      %v224 = vrot.slane %v222, 4
      %v226 = vadd.f32 %v217, %v224
      %v227 = vmul.f32 %v226, 0.5
      %v228 = vlaneseq
      %v229 = vshrl.u32 %v228, 7
      %v230 = vsub.s32 3, %v229
      %v231 = vrot.slane %v167, %v230
      %v232 = vmul.f32 %v231, %v167
      %v233 = vadd.f32 %v232, 1e-07
      %v234 = vrcp.pop %v233
      %v235 = vmul.f32 %v227, %v234
      %236 = vst [vmem:[%s142 + $0x3] sm:$0x7] %v235
      %p237 = scmp.lt.s32.totalorder %s16, 1
      %s238 = scalar_select %p237, %s16, 1
      %p239 = scmp.lt.s32.totalorder %s17, 0
      %s240 = scalar_select %p239, %s17, 0
      %s241 = sadd.s32 %s240, %s238
      %s242 = smul.addr %s241, 8
      %s243 = scalar_lea.vmem %s1, %s242
      // Predicated region
      $region25: #{correlation.1} parent=23 // pred_check
        %p244 = pneg %p72
      $region26: #{correlation.1} parent=23 // pred_check_branch
        %246 = sbr.rel (%p244) target = $region28
      $region27: #{correlation.1} parent=23 // pred_region
        _
      $region28: #{correlation.1} parent=23 // pred_fallthru
        _
    $region24: #{correlation.1} parent=5 // pred_fallthru
      _
    %p247 = scmp.le.s32.totalorder 2, %s7
    // Predicated region
    $region29: #{correlation.1} parent=5 // pred_check
      %p248 = pneg %p247
    $region30: #{correlation.1} parent=5 // pred_check_branch
      %250 = sbr.rel (%p248) target = $region32
    $region31: #{correlation.1} parent=5 // pred_region
      %s251 = ssub.s32 %s7, 2
      // Predicated region
      $region33: #{correlation.1} parent=31 // pred_check
        %p252 = pneg %p78
      $region34: #{correlation.1} parent=31 // pred_check_branch
        %254 = sbr.rel (%p252) target = $region36
      $region35: #{correlation.1} parent=31 // pred_region
        %p255 = scmp.lt.s32.totalorder %s18, 1
        %s256 = scalar_select %p255, %s18, 1
        %p257 = scmp.lt.s32.totalorder %s19, 0
        %s258 = scalar_select %p257, %s19, 0
        %s259 = sadd.s32 %s258, %s256
        %s260 = smul.addr %s259, 8
        %s261 = scalar_lea.vmem %s1, %s260
      $region36: #{correlation.1} parent=31 // pred_fallthru
        _
    $region32: #{correlation.1} parent=5 // pred_fallthru
      _
  $region6: #{correlation.1} parent=0 // loop_footer
    %s11 = sadd.s32 1, %s7
  $region7: #{correlation.1} parent=0 // loop_footer_branch
    %6 = sbr.rel target = $region3
  $region8: #{correlation.1} parent=0 // loop_exit
    _

</llo_original>
